<compile_context>
chip_gen: v7x
topology: tpu7x:2x2x1
jax: 0.10.0
libtpu: 0.0.40
codegen_flags: <defaults>
</compile_context>

<pallas_src>
import functools

import jax
import jax.numpy as jnp
from jax.experimental import pallas as pl
from jax.experimental.pallas import tpu as pltpu


def _fap_kernel(x_ref, w_ref, b_ref, out_ref, acc_ref, *, inv_t):
    # x_ref:   (b_tile, C, F, t_blk)  VMEM  (native dtype, streamed over T)
    # w_ref:   (C, 1)                 VMEM  (Conv1d(C->1,k=1) weight, channels on sublanes)
    # b_ref:   (1,)                   SMEM  (Conv1d bias, scalar)
    # out_ref: (b_tile, C)            VMEM  (resident across the T grid axis)
    # acc_ref: (b_tile, C, F)         VMEM  f32 scratch, time-sum accumulator
    t = pl.program_id(1)

    @pl.when(t == 0)
    def _():
        acc_ref[...] = jnp.zeros_like(acc_ref)

    # Streaming time reduction: upcast per block, accumulate in f32.
    acc_ref[...] += jnp.sum(x_ref[...].astype(jnp.float32), axis=-1)

    @pl.when(t == pl.num_programs(1) - 1)
    def _():
        x_mean = acc_ref[...] * inv_t                                   # (b, C, F)

        # 1x1 Conv1d (C -> 1): VPU multiply + sublane reduce (no MXU for a K=C mat-vec).
        logits = jnp.sum(x_mean * w_ref[...], axis=1, keepdims=True)    # (b, 1, F)
        logits = logits + b_ref[0]

        # Sigmoid via exp + exact reciprocal (keeps 1e-4 tolerance).
        scores = pl.reciprocal(1.0 + jnp.exp(-logits))                  # (b, 1, F)

        # Softmax over frequency (lane axis).
        m = jnp.max(scores, axis=-1, keepdims=True)
        e = jnp.exp(scores - m)
        att = e * pl.reciprocal(jnp.sum(e, axis=-1, keepdims=True))     # (b, 1, F)

        # Attentive pooling: weighted sum over frequency -> lane-dense (b, C) store.
        out_ref[...] = jnp.sum(x_mean * att, axis=-1).astype(out_ref.dtype)


def frequency_attentive_pooling_pallas(x, conv_w, conv_b, *, b_tile=None, t_blk=None):
    """x: (B, C, F, T) any float dtype; conv_w: torch Conv1d weight (1, C, 1); conv_b: (1,)."""
    B, C, F, T = x.shape
    f32 = jnp.float32
    itemsize = jnp.dtype(x.dtype).itemsize

    w_col = conv_w.reshape(C, 1).astype(f32)     # channels -> sublane axis (no in-kernel reshape)
    b_s = conv_b.reshape(1).astype(f32)

    # ---- batch tile: multiple of 8 when possible (valid 2D out blocks + parallel axis) ----
    if b_tile is None:
        b_tile = 8 if (B % 8 == 0) else B
    # TODO(synk): for large B not divisible by 8, tile batch via a (B,1,C)-shaped output.
    assert B % b_tile == 0, "b_tile must divide B"

    # ---- time block: full T if small, else a 128-multiple sized to the VMEM budget ----
    if t_blk is None:
        if T <= 512:
            t_blk = T
        else:
            t_blk = 512
            while t_blk > 128 and 2 * b_tile * C * F * t_blk * itemsize > (40 << 20):
                t_blk -= 128

    # Zero-pad T to a multiple of t_blk (zeros do not change the time-sum; the mean
    # divides by the true T).
    num_t = pl.cdiv(T, t_blk)
    T_pad = num_t * t_blk
    if T_pad != T:
        x = jnp.pad(x, ((0, 0), (0, 0), (0, 0), (0, T_pad - T)))

    # ---- VMEM budget: double-buffered x block + accumulator scratch, capped for v7x ----
    x_blk_bytes = b_tile * C * F * t_blk * itemsize
    acc_bytes = b_tile * C * F * 4
    vmem_need = 2 * x_blk_bytes + acc_bytes + (1 << 20)
    vmem_limit_bytes = int(min(max(2 * vmem_need, 32 << 20), 56 << 20))

    cost = pl.CostEstimate(
        flops=int(2 * B * C * F * T + 8 * B * C * F),
        transcendentals=int(4 * B * F),
        bytes_accessed=int(B * C * F * T * itemsize + B * C * 4 + C * 4 + 4),
    )

    kernel = functools.partial(_fap_kernel, inv_t=1.0 / T)

    return pl.pallas_call(
        kernel,
        out_shape=jax.ShapeDtypeStruct((B, C), f32),
        grid_spec=pltpu.PrefetchScalarGridSpec(
            num_scalar_prefetch=0,
            grid=(B // b_tile, num_t),
            in_specs=[
                # x streamed over time; F kept whole, C kept whole.
                pl.BlockSpec((b_tile, C, F, t_blk), lambda b, t: (b, 0, 0, t)),
                # conv weight: whole (C, 1) tile every step.
                pl.BlockSpec((C, 1), lambda b, t: (0, 0)),
                # conv bias scalar in SMEM, untiled.
                pl.BlockSpec(memory_space=pltpu.MemorySpace.SMEM),
            ],
            out_specs=pl.BlockSpec((b_tile, C), lambda b, t: (b, 0)),
            scratch_shapes=[pltpu.VMEM((b_tile, C, F), jnp.float32)],
        ),
        compiler_params=pltpu.CompilerParams(
            dimension_semantics=("parallel", "arbitrary"),
            vmem_limit_bytes=vmem_limit_bytes,
        ),
        cost_estimate=cost,
    )(x, w_col, b_s)


# ---------------- pure-JAX reference (mirrors the PyTorch forward) ----------------
def frequency_attentive_pooling_ref(x, conv_w, conv_b):
    B, C, F, T = x.shape
    x_mean = jnp.mean(x.astype(jnp.float32), axis=-1)                    # (B, C, F)
    logits = jnp.einsum('c,bcf->bf', conv_w.reshape(C), x_mean) + conv_b  # (B, F)
    scores = jax.nn.sigmoid(logits)[:, None, :]                          # (B, 1, F)
    att = jax.nn.softmax(scores, axis=-1)                                # (B, 1, F)
    return jnp.sum(x_mean * att, axis=-1)                                # (B, C)


if __name__ == "__main__":
    B, C, F, T = 2, 8, 16, 16     # (batch, in_channels, freq bins, time frames)
    key = jax.random.PRNGKey(0)
    kx, kw, kb = jax.random.split(key, 3)
    x = jax.random.normal(kx, (B, C, F, T), jnp.float32)
    conv_w = 0.3 * jax.random.normal(kw, (1, C, 1), jnp.float32)   # Conv1d(C, 1, 1).weight
    conv_b = 0.1 * jax.random.normal(kb, (1,), jnp.float32)        # Conv1d(C, 1, 1).bias

    out = frequency_attentive_pooling_pallas(x, conv_w, conv_b)
    out = jax.block_until_ready(out)

    ref = frequency_attentive_pooling_ref(x, conv_w, conv_b)
    assert out.shape == (B, C)
    err = float(jnp.max(jnp.abs(out - ref)))
    assert err < 1e-4, f"max abs error vs reference: {err}"
    print("KERNEL_OK")
</pallas_src>

<mosaic_0001>
module attributes {stable_mosaic.version = 11 : i64} {
  func.func @_fap_kernel(%arg0: i32, %arg1: i32, %arg2: memref<2x8x16x16xf32, #tpu.memory_space<vmem>>, %arg3: memref<8x1xf32, #tpu.memory_space<vmem>>, %arg4: memref<1xf32, #tpu.memory_space<smem>>, %arg5: memref<2x8xf32, #tpu.memory_space<vmem>>, %arg6: memref<2x8x16xf32, #tpu.memory_space<vmem>>) attributes {dimension_semantics = [#tpu.dimension_semantics<parallel>, #tpu.dimension_semantics<arbitrary>], iteration_bounds = array<i64: 1, 1>, scalar_prefetch = 0 : i64, scratch_operands = 1 : i64, tpu.core_type = #tpu.core_type<tc>, window_params = [{transform_indices = @transform_0, window_bounds = array<i64: 2, 8, 16, 16>}, {pipeline_mode = #tpu.pipeline_mode<synchronous>, transform_indices = @transform_1, window_bounds = array<i64: 8, 1>}, {transform_indices = @transform_2, window_bounds = array<i64: 1>}, {transform_indices = @transform_3, window_bounds = array<i64: 2, 8>}]} {
    %c0_i32 = arith.constant 0 : i32
    %0 = arith.cmpi eq, %arg1, %c0_i32 : i32
    %1 = arith.extui %0 : i1 to i32
    %c0_i32_0 = arith.constant 0 : i32
    %2 = arith.cmpi ne, %1, %c0_i32_0 : i32
    scf.if %2 {
      %cst_12 = arith.constant 0.000000e+00 : f32
      %11 = vector.broadcast %cst_12 : f32 to vector<2x8x16xf32>
      %c0_13 = arith.constant 0 : index
      %c0_14 = arith.constant 0 : index
      %c0_15 = arith.constant 0 : index
      %12 = vector.load %arg6[%c0_13, %c0_14, %c0_15] : memref<2x8x16xf32, #tpu.memory_space<vmem>>, vector<2x8x16xf32>
      tpu.vector_store %arg6[%c0_13, %c0_14, %c0_15], %11 {strides = array<i32>} : memref<2x8x16xf32, #tpu.memory_space<vmem>>, vector<2x8x16xf32>,
    } else {
    }
    %c0 = arith.constant 0 : index
    %c0_1 = arith.constant 0 : index
    %c0_2 = arith.constant 0 : index
    %3 = vector.load %arg6[%c0, %c0_1, %c0_2] : memref<2x8x16xf32, #tpu.memory_space<vmem>>, vector<2x8x16xf32>
    %c0_3 = arith.constant 0 : index
    %c0_4 = arith.constant 0 : index
    %c0_5 = arith.constant 0 : index
    %c0_6 = arith.constant 0 : index
    %4 = vector.load %arg2[%c0_3, %c0_4, %c0_5, %c0_6] : memref<2x8x16x16xf32, #tpu.memory_space<vmem>>, vector<2x8x16x16xf32>
    %cst = arith.constant dense<0.000000e+00> : vector<2x8x16xf32>
    %5 = vector.multi_reduction <add>, %4, %cst [3] : vector<2x8x16x16xf32> to vector<2x8x16xf32>
    %6 = arith.addf %3, %5 : vector<2x8x16xf32>
    %c0_7 = arith.constant 0 : index
    %c0_8 = arith.constant 0 : index
    %c0_9 = arith.constant 0 : index
    %7 = vector.load %arg6[%c0_7, %c0_8, %c0_9] : memref<2x8x16xf32, #tpu.memory_space<vmem>>, vector<2x8x16xf32>
    tpu.vector_store %arg6[%c0_7, %c0_8, %c0_9], %6 {strides = array<i32>} : memref<2x8x16xf32, #tpu.memory_space<vmem>>, vector<2x8x16xf32>,
    %c0_i32_10 = arith.constant 0 : i32
    %8 = arith.cmpi eq, %arg1, %c0_i32_10 : i32
    %9 = arith.extui %8 : i1 to i32
    %c0_i32_11 = arith.constant 0 : i32
    %10 = arith.cmpi ne, %9, %c0_i32_11 : i32
    scf.if %10 {
      %c0_12 = arith.constant 0 : index
      %c0_13 = arith.constant 0 : index
      %c0_14 = arith.constant 0 : index
      %11 = vector.load %arg6[%c0_12, %c0_13, %c0_14] : memref<2x8x16xf32, #tpu.memory_space<vmem>>, vector<2x8x16xf32>
      %cst_15 = arith.constant 6.250000e-02 : f32
      %12 = vector.broadcast %cst_15 : f32 to vector<2x8x16xf32>
      %13 = arith.mulf %11, %12 : vector<2x8x16xf32>
      %c0_16 = arith.constant 0 : index
      %c0_17 = arith.constant 0 : index
      %14 = vector.load %arg3[%c0_16, %c0_17] : memref<8x1xf32, #tpu.memory_space<vmem>>, vector<8x1xf32>
      %15 = vector.shape_cast %14 : vector<8x1xf32> to vector<1x8x1xf32>
      %16 = vector.broadcast %15 : vector<1x8x1xf32> to vector<2x8x16xf32>
      %17 = arith.mulf %13, %16 : vector<2x8x16xf32>
      %cst_18 = arith.constant dense<0.000000e+00> : vector<2x16xf32>
      %18 = vector.multi_reduction <add>, %17, %cst_18 [1] : vector<2x8x16xf32> to vector<2x16xf32>
      %19 = vector.shape_cast %18 : vector<2x16xf32> to vector<2x1x16xf32>
      %c0_19 = arith.constant 0 : index
      %20 = memref.load %arg4[%c0_19] : memref<1xf32, #tpu.memory_space<smem>>
      %21 = vector.broadcast %20 : f32 to vector<2x1x16xf32>
      %22 = arith.addf %19, %21 : vector<2x1x16xf32>
      %cst_20 = arith.constant 0.000000e+00 : f32
      %23 = vector.broadcast %cst_20 : f32 to vector<2x1x16xf32>
      %24 = arith.subf %23, %22 : vector<2x1x16xf32>
      %25 = math.exp %24 : vector<2x1x16xf32>
      %cst_21 = arith.constant 1.000000e+00 : f32
      %26 = vector.broadcast %cst_21 : f32 to vector<2x1x16xf32>
      %27 = arith.addf %26, %25 : vector<2x1x16xf32>
      %28 = tpu.reciprocal %27 : vector<2x1x16xf32> -> vector<2x1x16xf32>
      %cst_22 = arith.constant dense<0xFF800000> : vector<2x1xf32>
      %29 = vector.multi_reduction <maximumf>, %28, %cst_22 [2] : vector<2x1x16xf32> to vector<2x1xf32>
      %30 = vector.shape_cast %29 : vector<2x1xf32> to vector<2x1x1xf32>
      %31 = vector.broadcast %30 : vector<2x1x1xf32> to vector<2x1x16xf32>
      %32 = arith.subf %28, %31 : vector<2x1x16xf32>
      %33 = math.exp %32 : vector<2x1x16xf32>
      %cst_23 = arith.constant dense<0.000000e+00> : vector<2x1xf32>
      %34 = vector.multi_reduction <add>, %33, %cst_23 [2] : vector<2x1x16xf32> to vector<2x1xf32>
      %35 = vector.shape_cast %34 : vector<2x1xf32> to vector<2x1x1xf32>
      %36 = tpu.reciprocal %35 : vector<2x1x1xf32> -> vector<2x1x1xf32>
      %37 = vector.broadcast %36 : vector<2x1x1xf32> to vector<2x1x16xf32>
      %38 = arith.mulf %33, %37 : vector<2x1x16xf32>
      %39 = vector.broadcast %38 : vector<2x1x16xf32> to vector<2x8x16xf32>
      %40 = arith.mulf %13, %39 : vector<2x8x16xf32>
      %cst_24 = arith.constant dense<0.000000e+00> : vector<2x8xf32>
      %41 = vector.multi_reduction <add>, %40, %cst_24 [2] : vector<2x8x16xf32> to vector<2x8xf32>
      %c0_25 = arith.constant 0 : index
      %c0_26 = arith.constant 0 : index
      %42 = vector.load %arg5[%c0_25, %c0_26] : memref<2x8xf32, #tpu.memory_space<vmem>>, vector<2x8xf32>
      tpu.vector_store %arg5[%c0_25, %c0_26], %41 {strides = array<i32>} : memref<2x8xf32, #tpu.memory_space<vmem>>, vector<2x8xf32>,
    } else {
    }
    return
  }
  func.func @transform_0(%arg0: i32, %arg1: i32) -> (i32, i32, i32, i32) {
    %c0_i32 = arith.constant 0 : i32
    %c0_i32_0 = arith.constant 0 : i32
    %c0_i32_1 = arith.constant 0 : i32
    return %arg0, %c0_i32, %c0_i32_0, %arg1 : i32, i32, i32, i32
  }
  func.func @transform_1(%arg0: i32, %arg1: i32) -> (i32, i32) {
    %c0_i32 = arith.constant 0 : i32
    %c0_i32_0 = arith.constant 0 : i32
    %c0_i32_1 = arith.constant 0 : i32
    return %c0_i32, %c0_i32_0 : i32, i32
  }
  func.func @transform_2(%arg0: i32, %arg1: i32) -> i32 {
    %c0_i32 = arith.constant 0 : i32
    %c0_i32_0 = arith.constant 0 : i32
    return %c0_i32 : i32
  }
  func.func @transform_3(%arg0: i32, %arg1: i32) -> (i32, i32) {
    %c0_i32 = arith.constant 0 : i32
    %c0_i32_0 = arith.constant 0 : i32
    return %arg0, %c0_i32 : i32, i32
  }
}

</mosaic_0001>

<llo_original>
// kernel: tpu_custom_call.1
$region0: #{tpu_custom_call.1}
  #allocation0 [shape = 'u32[]', space=smem, size = 0x4, offset = 0x4, fixed_abs, tag = 'smem constant byte address 0x4 - core index']
  #allocation1 [shape = 'u32[144,128]{1,0:T(1,128)}', space=vmem, size = 0x12000, scoped, tag = 'internal scratch']
  #allocation2 [shape = 'f32[2,8,16]{2,1,0:T(8,128)}', space=vmem, size = 0x2000, scoped, tag = 'scratch operand']
  #allocation3 [shape = 'f32[1]{0:T(128)S(6)}', space=smem, size = 0x200, scoped, tag = 'scoped memory for tpu_custom_call.1']
  %s0 = inlined_call_operand.hbm [shape: f32[2,8,16,16], index: 0, kind: input, shape index: {}]
  %s1 = inlined_call_operand.vmem [shape: f32[8,1], index: 1, kind: input, shape index: {}]
  %s2 = inlined_call_operand.<no memory space> [shape: f32[1], index: 2, kind: input, shape index: {}]
  %s3 = inlined_call_operand.hbm [shape: f32[2,8], index: 3, kind: output, shape index: {}]
  %s4 = sld [smem:[#allocation0]]
  $region34: #{tpu_custom_call.1} parent=0
    _
  %s6 = ssub.s32 1, %s4
  %s7 = scalar_select 0, %s6, %s4
  %8 = sst [smem:[#allocation3]] %s2
  $region1: #{tpu_custom_call.1} parent=0
    #allocation4 [shape = 'u8[131072]{0}', space=vmem, size = 0x20000, scoped, tag = 'input window, operand 0, single buffered']
    #allocation5 [shape = 's32[1]{0}', space=sflag, size = 0x4, scoped, tag = 'scoped memory for tpu_custom_call.1']
    #allocation6 [shape = 's32[1]{0}', space=sflag, size = 0x4, scoped, tag = 'scoped memory for tpu_custom_call.1']
    #allocation7 [shape = 'u8[1024]{0}', space=vmem, size = 0x400, scoped, tag = 'output window, operand 0, single buffered']
    %9 = vsyncpa [#allocation5], 0
    %10 = vsyncpa [#allocation6], 0
    // Predicated region
    $region2: #{tpu_custom_call.1} parent=1 // pred_check
      _
    $region3: #{tpu_custom_call.1} parent=1 // pred_check_branch
      %12 = sbr.rel (0) target = $region5
    $region4: #{tpu_custom_call.1} parent=1 // pred_region
      %s14 = ssub.s32 4096, 4096
      %15 = vsyncadd [#allocation5], %s14
      %s16 = sshll.u32 [#allocation4], 4
      %s17 = int_to_ptr.vmem [resolvable:$true] %s16
      %22 = dma.hbm_to_vmem [thread:$0]  %s0, 4096, %s17, [#allocation5], 128, 128, 8
    $region5: #{tpu_custom_call.1} parent=1 // pred_fallthru
      _
    // Predicated region
    $region6: #{tpu_custom_call.1} parent=1 // pred_check
      _
    $region7: #{tpu_custom_call.1} parent=1 // pred_check_branch
      %24 = sbr.rel (0) target = $region9
    $region8: #{tpu_custom_call.1} parent=1 // pred_region
      _
    $region9: #{tpu_custom_call.1} parent=1 // pred_fallthru
      _
    // Predicated region
    $region10: #{tpu_custom_call.1} parent=1 // pred_check
      _
    $region11: #{tpu_custom_call.1} parent=1 // pred_check_branch
      %26 = sbr.rel (0) target = $region13
    $region12: #{tpu_custom_call.1} parent=1 // pred_region
      _
    $region13: #{tpu_custom_call.1} parent=1 // pred_fallthru
      _
    // Predicated region
    $region14: #{tpu_custom_call.1} parent=1 // pred_check
      _
    $region15: #{tpu_custom_call.1} parent=1 // pred_check_branch
      %28 = sbr.rel (0) target = $region17
    $region16: #{tpu_custom_call.1} parent=1 // pred_region
      %29 = dma.done [#allocation5], 4096
    $region17: #{tpu_custom_call.1} parent=1 // pred_fallthru
      _
    %p30 = scmp.eq.s32.totalorder 0, 0
    // Predicated region
    $region18: #{tpu_custom_call.1} parent=1 // pred_check
      %p31 = pneg %p30
    $region19: #{tpu_custom_call.1} parent=1 // pred_check_branch
      %33 = sbr.rel (%p31) target = $region21
    $region20: #{tpu_custom_call.1} parent=1 // pred_region
      %vm34 = vcmask 130048
      %35 = vst.msk [vmem:[#allocation2] sm:$0xff] %vm34, 0.0
      %36 = vst.msk [vmem:[#allocation2 + $0x8] sm:$0xff] %vm34, 0.0
    $region21: #{tpu_custom_call.1} parent=1 // pred_fallthru
      _
    %v37 = vld [vmem:[#allocation2] sm:$0xff]
    %v38 = vld [vmem:[#allocation2 + $0x8] sm:$0xff]
    %v39 = vld [vmem:[#allocation4] sm:$0xff]
    %v40 = vld [vmem:[#allocation4 + $0x8] sm:$0xff]
    %v41 = vld [vmem:[#allocation4 + $0x10] sm:$0xff]
    %v42 = vld [vmem:[#allocation4 + $0x18] sm:$0xff]
    %v43 = vld [vmem:[#allocation4 + $0x20] sm:$0xff]
    %v44 = vld [vmem:[#allocation4 + $0x28] sm:$0xff]
    %v45 = vld [vmem:[#allocation4 + $0x30] sm:$0xff]
    %v46 = vld [vmem:[#allocation4 + $0x38] sm:$0xff]
    %v47 = vld [vmem:[#allocation4 + $0x40] sm:$0xff]
    %v48 = vld [vmem:[#allocation4 + $0x48] sm:$0xff]
    %v49 = vld [vmem:[#allocation4 + $0x50] sm:$0xff]
    %v50 = vld [vmem:[#allocation4 + $0x58] sm:$0xff]
    %v51 = vld [vmem:[#allocation4 + $0x60] sm:$0xff]
    %v52 = vld [vmem:[#allocation4 + $0x68] sm:$0xff]
    %v53 = vld [vmem:[#allocation4 + $0x70] sm:$0xff]
    %v54 = vld [vmem:[#allocation4 + $0x78] sm:$0xff]
    %v55 = vld [vmem:[#allocation4 + $0x80] sm:$0xff]
    %v56 = vld [vmem:[#allocation4 + $0x88] sm:$0xff]
    %v57 = vld [vmem:[#allocation4 + $0x90] sm:$0xff]
    %v58 = vld [vmem:[#allocation4 + $0x98] sm:$0xff]
    %v59 = vld [vmem:[#allocation4 + $0xa0] sm:$0xff]
    %v60 = vld [vmem:[#allocation4 + $0xa8] sm:$0xff]
    %v61 = vld [vmem:[#allocation4 + $0xb0] sm:$0xff]
    %v62 = vld [vmem:[#allocation4 + $0xb8] sm:$0xff]
    %v63 = vld [vmem:[#allocation4 + $0xc0] sm:$0xff]
    %v64 = vld [vmem:[#allocation4 + $0xc8] sm:$0xff]
    %v65 = vld [vmem:[#allocation4 + $0xd0] sm:$0xff]
    %v66 = vld [vmem:[#allocation4 + $0xd8] sm:$0xff]
    %v67 = vld [vmem:[#allocation4 + $0xe0] sm:$0xff]
    %v68 = vld [vmem:[#allocation4 + $0xe8] sm:$0xff]
    %v69 = vld [vmem:[#allocation4 + $0xf0] sm:$0xff]
    %v70 = vld [vmem:[#allocation4 + $0xf8] sm:$0xff]
    %vm71 = vcmask 130048
    %v72 = vsel %vm71, %v39, 0.0
    %73 = vadd.xlane.f32.xlu0 %v72
    %v74 = vpop.xlane.xlu0 %73
    %v75 = vsel %vm71, %v40, 0.0
    %76 = vadd.xlane.f32.xlu0 %v75
    %v77 = vpop.xlane.xlu0 %76
    %v78 = vsel %vm71, %v41, 0.0
    %79 = vadd.xlane.f32.xlu0 %v78
    %v80 = vpop.xlane.xlu0 %79
    %v81 = vsel %vm71, %v42, 0.0
    %82 = vadd.xlane.f32.xlu0 %v81
    %v83 = vpop.xlane.xlu0 %82
    %v84 = vsel %vm71, %v43, 0.0
    %85 = vadd.xlane.f32.xlu0 %v84
    %v86 = vpop.xlane.xlu0 %85
    %v87 = vsel %vm71, %v44, 0.0
    %88 = vadd.xlane.f32.xlu0 %v87
    %v89 = vpop.xlane.xlu0 %88
    %v90 = vsel %vm71, %v45, 0.0
    %91 = vadd.xlane.f32.xlu0 %v90
    %v92 = vpop.xlane.xlu0 %91
    %v93 = vsel %vm71, %v46, 0.0
    %94 = vadd.xlane.f32.xlu0 %v93
    %v95 = vpop.xlane.xlu0 %94
    %v96 = vsel %vm71, %v47, 0.0
    %97 = vadd.xlane.f32.xlu0 %v96
    %v98 = vpop.xlane.xlu0 %97
    %v99 = vsel %vm71, %v48, 0.0
    %100 = vadd.xlane.f32.xlu0 %v99
    %v101 = vpop.xlane.xlu0 %100
    %v102 = vsel %vm71, %v49, 0.0
    %103 = vadd.xlane.f32.xlu0 %v102
    %v104 = vpop.xlane.xlu0 %103
    %v105 = vsel %vm71, %v50, 0.0
    %106 = vadd.xlane.f32.xlu0 %v105
    %v107 = vpop.xlane.xlu0 %106
    %v108 = vsel %vm71, %v51, 0.0
    %109 = vadd.xlane.f32.xlu0 %v108
    %v110 = vpop.xlane.xlu0 %109
    %v111 = vsel %vm71, %v52, 0.0
    %112 = vadd.xlane.f32.xlu0 %v111
    %v113 = vpop.xlane.xlu0 %112
    %v114 = vsel %vm71, %v53, 0.0
    %115 = vadd.xlane.f32.xlu0 %v114
    %v116 = vpop.xlane.xlu0 %115
    %v117 = vsel %vm71, %v54, 0.0
    %118 = vadd.xlane.f32.xlu0 %v117
    %v119 = vpop.xlane.xlu0 %118
    %v120 = vsel %vm71, %v55, 0.0
    %121 = vadd.xlane.f32.xlu0 %v120
    %v122 = vpop.xlane.xlu0 %121
    %v123 = vsel %vm71, %v56, 0.0
    %124 = vadd.xlane.f32.xlu0 %v123
    %v125 = vpop.xlane.xlu0 %124
    %v126 = vsel %vm71, %v57, 0.0
    %127 = vadd.xlane.f32.xlu0 %v126
    %v128 = vpop.xlane.xlu0 %127
    %v129 = vsel %vm71, %v58, 0.0
    %130 = vadd.xlane.f32.xlu0 %v129
    %v131 = vpop.xlane.xlu0 %130
    %v132 = vsel %vm71, %v59, 0.0
    %133 = vadd.xlane.f32.xlu0 %v132
    %v134 = vpop.xlane.xlu0 %133
    %v135 = vsel %vm71, %v60, 0.0
    %136 = vadd.xlane.f32.xlu0 %v135
    %v137 = vpop.xlane.xlu0 %136
    %v138 = vsel %vm71, %v61, 0.0
    %139 = vadd.xlane.f32.xlu0 %v138
    %v140 = vpop.xlane.xlu0 %139
    %v141 = vsel %vm71, %v62, 0.0
    %142 = vadd.xlane.f32.xlu0 %v141
    %v143 = vpop.xlane.xlu0 %142
    %v144 = vsel %vm71, %v63, 0.0
    %145 = vadd.xlane.f32.xlu0 %v144
    %v146 = vpop.xlane.xlu0 %145
    %v147 = vsel %vm71, %v64, 0.0
    %148 = vadd.xlane.f32.xlu0 %v147
    %v149 = vpop.xlane.xlu0 %148
    %v150 = vsel %vm71, %v65, 0.0
    %151 = vadd.xlane.f32.xlu0 %v150
    %v152 = vpop.xlane.xlu0 %151
    %v153 = vsel %vm71, %v66, 0.0
    %154 = vadd.xlane.f32.xlu0 %v153
    %v155 = vpop.xlane.xlu0 %154
    %v156 = vsel %vm71, %v67, 0.0
    %157 = vadd.xlane.f32.xlu0 %v156
    %v158 = vpop.xlane.xlu0 %157
    %v159 = vsel %vm71, %v68, 0.0
    %160 = vadd.xlane.f32.xlu0 %v159
    %v161 = vpop.xlane.xlu0 %160
    %v162 = vsel %vm71, %v69, 0.0
    %163 = vadd.xlane.f32.xlu0 %v162
    %v164 = vpop.xlane.xlu0 %163
    %v165 = vsel %vm71, %v70, 0.0
    %166 = vadd.xlane.f32.xlu0 %v165
    %v167 = vpop.xlane.xlu0 %166
    %v200 = vlaneseq
    %v201 = vand.u32 %v200, 127
    %v202 = vlaneseq
    %v203 = vshrl.u32 %v202, 7
    %v204 = vsub.s32 %v201, %v203
    %v205 = vrot.slane %v74, %v204
    %v206 = vadd.s32 %v201, 4294967288
    %v207 = vlaneseq
    %v208 = vshrl.u32 %v207, 7
    %v209 = vsub.s32 %v206, %v208
    %v210 = vrot.slane %v77, %v209
    %vm211 = vcmask 130112
    %v212 = vsel %vm211, %v210, %v205
    %v213 = vlaneseq
    %v214 = vshrl.u32 %v213, 7
    %v215 = vsub.s32 %v201, %v214
    %v216 = vrot.slane %v80, %v215
    %v217 = vlaneseq
    %v218 = vshrl.u32 %v217, 7
    %v219 = vsub.s32 %v206, %v218
    %v220 = vrot.slane %v83, %v219
    %v221 = vsel %vm211, %v220, %v216
    %v222 = vlaneseq
    %v223 = vshrl.u32 %v222, 7
    %v224 = vsub.s32 %v201, %v223
    %v225 = vrot.slane %v86, %v224
    %v226 = vlaneseq
    %v227 = vshrl.u32 %v226, 7
    %v228 = vsub.s32 %v206, %v227
    %v229 = vrot.slane %v89, %v228
    %v230 = vsel %vm211, %v229, %v225
    %v231 = vlaneseq
    %v232 = vshrl.u32 %v231, 7
    %v233 = vsub.s32 %v201, %v232
    %v234 = vrot.slane %v92, %v233
    %v235 = vlaneseq
    %v236 = vshrl.u32 %v235, 7
    %v237 = vsub.s32 %v206, %v236
    %v238 = vrot.slane %v95, %v237
    %v239 = vsel %vm211, %v238, %v234
    %v240 = vlaneseq
    %v241 = vshrl.u32 %v240, 7
    %v242 = vsub.s32 %v201, %v241
    %v243 = vrot.slane %v98, %v242
    %v244 = vlaneseq
    %v245 = vshrl.u32 %v244, 7
    %v246 = vsub.s32 %v206, %v245
    %v247 = vrot.slane %v101, %v246
    %v248 = vsel %vm211, %v247, %v243
    %v249 = vlaneseq
    %v250 = vshrl.u32 %v249, 7
    %v251 = vsub.s32 %v201, %v250
    %v252 = vrot.slane %v104, %v251
    %v253 = vlaneseq
    %v254 = vshrl.u32 %v253, 7
    %v255 = vsub.s32 %v206, %v254
    %v256 = vrot.slane %v107, %v255
    %v257 = vsel %vm211, %v256, %v252
    %v258 = vlaneseq
    %v259 = vshrl.u32 %v258, 7
    %v260 = vsub.s32 %v201, %v259
    %v261 = vrot.slane %v110, %v260
    %v262 = vlaneseq
    %v263 = vshrl.u32 %v262, 7
    %v264 = vsub.s32 %v206, %v263
    %v265 = vrot.slane %v113, %v264
    %v266 = vsel %vm211, %v265, %v261
    %v267 = vlaneseq
    %v268 = vshrl.u32 %v267, 7
    %v269 = vsub.s32 %v201, %v268
    %v270 = vrot.slane %v116, %v269
    %v271 = vlaneseq
    %v272 = vshrl.u32 %v271, 7
    %v273 = vsub.s32 %v206, %v272
    %v274 = vrot.slane %v119, %v273
    %v275 = vsel %vm211, %v274, %v270
    %v276 = vlaneseq
    %v277 = vshrl.u32 %v276, 7
    %v278 = vsub.s32 %v201, %v277
    %v279 = vrot.slane %v122, %v278
    %v280 = vlaneseq
    %v281 = vshrl.u32 %v280, 7
    %v282 = vsub.s32 %v206, %v281
    %v283 = vrot.slane %v125, %v282
    %v284 = vsel %vm211, %v283, %v279
    %v285 = vlaneseq
    %v286 = vshrl.u32 %v285, 7
    %v287 = vsub.s32 %v201, %v286
    %v288 = vrot.slane %v128, %v287
    %v289 = vlaneseq
    %v290 = vshrl.u32 %v289, 7
    %v291 = vsub.s32 %v206, %v290
    %v292 = vrot.slane %v131, %v291
    %v293 = vsel %vm211, %v292, %v288
    %v294 = vlaneseq
    %v295 = vshrl.u32 %v294, 7
    %v296 = vsub.s32 %v201, %v295
    %v297 = vrot.slane %v134, %v296
    %v298 = vlaneseq
    %v299 = vshrl.u32 %v298, 7
    %v300 = vsub.s32 %v206, %v299
    %v301 = vrot.slane %v137, %v300
    %v302 = vsel %vm211, %v301, %v297
    %v303 = vlaneseq
    %v304 = vshrl.u32 %v303, 7
    %v305 = vsub.s32 %v201, %v304
    %v306 = vrot.slane %v140, %v305
    %v307 = vlaneseq
    %v308 = vshrl.u32 %v307, 7
    %v309 = vsub.s32 %v206, %v308
    %v310 = vrot.slane %v143, %v309
    %v311 = vsel %vm211, %v310, %v306
    %v312 = vlaneseq
    %v313 = vshrl.u32 %v312, 7
    %v314 = vsub.s32 %v201, %v313
    %v315 = vrot.slane %v146, %v314
    %v316 = vlaneseq
    %v317 = vshrl.u32 %v316, 7
    %v318 = vsub.s32 %v206, %v317
    %v319 = vrot.slane %v149, %v318
    %v320 = vsel %vm211, %v319, %v315
    %v321 = vlaneseq
    %v322 = vshrl.u32 %v321, 7
    %v323 = vsub.s32 %v201, %v322
    %v324 = vrot.slane %v152, %v323
    %v325 = vlaneseq
    %v326 = vshrl.u32 %v325, 7
    %v327 = vsub.s32 %v206, %v326
    %v328 = vrot.slane %v155, %v327
    %v329 = vsel %vm211, %v328, %v324
    %v330 = vlaneseq
    %v331 = vshrl.u32 %v330, 7
    %v332 = vsub.s32 %v201, %v331
    %v333 = vrot.slane %v158, %v332
    %v334 = vlaneseq
    %v335 = vshrl.u32 %v334, 7
    %v336 = vsub.s32 %v206, %v335
    %v337 = vrot.slane %v161, %v336
    %v338 = vsel %vm211, %v337, %v333
    %v339 = vlaneseq
    %v340 = vshrl.u32 %v339, 7
    %v341 = vsub.s32 %v201, %v340
    %v342 = vrot.slane %v164, %v341
    %v343 = vlaneseq
    %v344 = vshrl.u32 %v343, 7
    %v345 = vsub.s32 %v206, %v344
    %v346 = vrot.slane %v167, %v345
    %v347 = vsel %vm211, %v346, %v342
    %vm348 = vcmask 1041409
    %v349 = vsel %vm348, %v221, %v212
    %vm350 = vcmask 1042434
    %v351 = vsel %vm350, %v230, %v349
    %vm352 = vcmask 1043459
    %v353 = vsel %vm352, %v239, %v351
    %vm354 = vcmask 1044484
    %v355 = vsel %vm354, %v248, %v353
    %vm356 = vcmask 1045509
    %v357 = vsel %vm356, %v257, %v355
    %vm358 = vcmask 1046534
    %v359 = vsel %vm358, %v266, %v357
    %vm360 = vcmask 1047559
    %v361 = vsel %vm360, %v275, %v359
    %v362 = vsel %vm348, %v293, %v284
    %v363 = vsel %vm350, %v302, %v362
    %v364 = vsel %vm352, %v311, %v363
    %v365 = vsel %vm354, %v320, %v364
    %v366 = vsel %vm356, %v329, %v365
    %v367 = vsel %vm358, %v338, %v366
    %v368 = vsel %vm360, %v347, %v367
    %v371 = vadd.f32 %v37, %v361
    %v372 = vadd.f32 %v38, %v368
    %373 = vst.msk [vmem:[#allocation2] sm:$0xff] %vm71, %v371
    %374 = vst.msk [vmem:[#allocation2 + $0x8] sm:$0xff] %vm71, %v372
    // Predicated region
    $region22: #{tpu_custom_call.1} parent=1 // pred_check
      %p375 = pneg %p30
    $region23: #{tpu_custom_call.1} parent=1 // pred_check_branch
      %377 = sbr.rel (%p375) target = $region25
    $region24: #{tpu_custom_call.1} parent=1 // pred_region
      %v378 = vld [vmem:[#allocation2] sm:$0xff]
      %v379 = vld [vmem:[#allocation2 + $0x8] sm:$0xff]
      %v380 = vmul.f32 %v378, 0.0625
      %v381 = vmul.f32 %v379, 0.0625
      %v382 = vld [vmem:[%s1] sm:$0xff]
      %384 = vset.pattern.permute.xlu0 0
      %385 = vperm.xlu0 %384, %v382
      %v386 = vpop.permute.xlu0 %385
      %v388 = vmul.f32 %v380, %v386
      %v389 = vmul.f32 %v381, %v386
      %v390 = vsel %vm71, %v388, 0.0
      %v391 = vrot.slane %v390, 4
      %v392 = vadd.f32 %v390, %v391
      %v393 = vrot.slane %v392, 2
      %v394 = vadd.f32 %v392, %v393
      %v395 = vrot.slane %v394, 1
      %v396 = vadd.f32 %v394, %v395
      %v397 = vsel %vm71, %v389, 0.0
      %v398 = vrot.slane %v397, 4
      %v399 = vadd.f32 %v397, %v398
      %v400 = vrot.slane %v399, 2
      %v401 = vadd.f32 %v399, %v400
      %v402 = vrot.slane %v401, 1
      %v403 = vadd.f32 %v401, %v402
      %s404 = sld [smem:[#allocation3]]
      %v405 = vstv %s404
      %v406 = vadd.f32 %v396, %v405
      %v407 = vadd.f32 %v403, %v405
      %v408 = vsub.f32 0.0, %v406
      %v409 = vsub.f32 0.0, %v407
      %v410 = vmul.f32 %v408, 1.442695
      %v411 = vpow.pop %v410
      %v412 = vmul.f32 %v409, 1.442695
      %v413 = vpow.pop %v412
      %v414 = vadd.f32 %v411, 1.0
      %v415 = vadd.f32 %v413, 1.0
      %v416 = vrcp.pop %v414
      %v417 = vrcp.pop %v415
      %v418 = vsel %vm71, %v416, -inf
      %419 = vmax.xlane.f32.xlu0 %v418
      %v420 = vpop.xlane.xlu0 %419
      %v421 = vsel %vm71, %v417, -inf
      %422 = vmax.xlane.f32.xlu0 %v421
      %v423 = vpop.xlane.xlu0 %422
      %v424 = vsub.f32 %v416, %v420
      %v425 = vsub.f32 %v417, %v423
      %v426 = vmul.f32 %v424, 1.442695
      %v427 = vpow.pop %v426
      %v428 = vmul.f32 %v425, 1.442695
      %v429 = vpow.pop %v428
      %v430 = vsel %vm71, %v427, 0.0
      %431 = vadd.xlane.f32.xlu0 %v430
      %v432 = vpop.xlane.xlu0 %431
      %v433 = vsel %vm71, %v429, 0.0
      %434 = vadd.xlane.f32.xlu0 %v433
      %v435 = vpop.xlane.xlu0 %434
      %v436 = vrcp.pop %v432
      %v437 = vrcp.pop %v435
      %v438 = vmul.f32 %v427, %v436
      %v439 = vmul.f32 %v429, %v437
      %v440 = vmul.f32 %v380, %v438
      %v441 = vmul.f32 %v381, %v439
      %v442 = vsel %vm71, %v440, 0.0
      %443 = vadd.xlane.f32.xlu0 %v442
      %v444 = vpop.xlane.xlu0 %443
      %v445 = vsel %vm71, %v441, 0.0
      %446 = vadd.xlane.f32.xlu0 %v445
      %v447 = vpop.xlane.xlu0 %446
      %v450 = vlaneseq
      %v451 = vshrl.u32 %v450, 7
      %v452 = vsub.s32 %v201, %v451
      %v453 = vrot.slane %v444, %v452
      %v454 = vlaneseq
      %v455 = vshrl.u32 %v454, 7
      %v456 = vsub.s32 %v201, %v455
      %v457 = vrot.slane %v447, %v456
      %v458 = vsel %vm348, %v457, %v453
      %vm460 = vcmask 58368
      %461 = vst.msk [vmem:[#allocation7] sm:$0x3] %vm460, %v458
    $region25: #{tpu_custom_call.1} parent=1 // pred_fallthru
      _
    // Predicated region
    $region26: #{tpu_custom_call.1} parent=1 // pred_check
      _
    $region27: #{tpu_custom_call.1} parent=1 // pred_check_branch
      %463 = sbr.rel (0) target = $region29
    $region28: #{tpu_custom_call.1} parent=1 // pred_region
      %s465 = ssub.s32 32, 32
      %466 = vsyncadd [#allocation6], %s465
      %s468 = sshll.u32 [#allocation7], 4
      %s469 = int_to_ptr.vmem [resolvable:$true] %s468
      %471 = dma.vmem_to_hbm [thread:$0]  %s469, 32, %s3, [#allocation6]
    $region29: #{tpu_custom_call.1} parent=1 // pred_fallthru
      _
    // Predicated region
    $region30: #{tpu_custom_call.1} parent=1 // pred_check
      _
    $region31: #{tpu_custom_call.1} parent=1 // pred_check_branch
      %473 = sbr.rel (0) target = $region33
    $region32: #{tpu_custom_call.1} parent=1 // pred_region
      %474 = dma.done [#allocation6], 32
    $region33: #{tpu_custom_call.1} parent=1 // pred_fallthru
      _
    %475 = vsyncpa [#allocation5], 1
    %476 = vsyncpa [#allocation6], 1

</llo_original>
